<compile_context>
chip_gen: v5e
topology: v5e:2x2
jax: 0.10.0
libtpu: 0.0.40
codegen_flags: <defaults>
</compile_context>

<pallas_src>
import functools
import math

import jax
import jax.numpy as jnp
import numpy as np
from jax.experimental import pallas as pl
from jax.experimental.pallas import tpu as pltpu

EPS = 1e-5


# ---------------------------------------------------------------------------
# Fused kernel: retention + GroupNorm + gated output projection
# ---------------------------------------------------------------------------
def _msr_kernel(x_ref, wrg_ref, gamma_ref, gmask_ref, gn_w_ref, gn_b_ref,
                w_o_ref, o_ref, *, hidden):
    x = x_ref[...]                                               # (M, H) f32

    # One MXU push for both the retention and the gate pre-activation:
    #   X @ [W_R_blockdiag | W_G]  ->  (M, 2H)
    zw = jnp.dot(x, wrg_ref[...], preferred_element_type=jnp.float32)
    r = zw[:, :hidden]
    gate_in = zw[:, hidden:]

    # Per-head retention: X + gamma_h * tanh(X @ W_R_h) via block-diag W_R
    # and a per-channel gamma vector.
    y = x + gamma_ref[...] * jnp.tanh(r)

    # GroupNorm(heads, H) per row, centered form:
    #   m   = group mean      (y @ gmask, gmask[i,j] = 1/head_size if same group)
    #   var = group mean of (y - m)^2
    gm = gmask_ref[...]
    m = jnp.dot(y, gm, preferred_element_type=jnp.float32)
    d = y - m
    var = jnp.dot(d * d, gm, preferred_element_type=jnp.float32)
    yn = d * jax.lax.rsqrt(var + EPS) * gn_w_ref[...] + gn_b_ref[...]

    # (sigmoid(X @ W_G) * Yn) @ W_O
    gate = jax.nn.sigmoid(gate_in)
    o_ref[...] = jnp.dot(gate * yn, w_o_ref[...],
                         preferred_element_type=jnp.float32)


# ---------------------------------------------------------------------------
# pallas_call wrapper (single grid point, everything whole-block in VMEM)
# ---------------------------------------------------------------------------
def _whole(shape):
    nd = len(shape)
    return pl.BlockSpec(shape, lambda i, _nd=nd: (0,) * _nd)


def multiscale_retention_forward(x, params):
    B, d1, d2, H = x.shape
    M = B * d1 * d2
    assert M % 8 == 0, "row count must be a multiple of 8 (sublane tiling)"

    xr = x.reshape(M, H).astype(jnp.float32)
    weights = [params["w_rg"], params["gamma"], params["gmask"],
               params["gn_w"], params["gn_b"], params["w_o"]]

    out = pl.pallas_call(
        functools.partial(_msr_kernel, hidden=H),
        out_shape=jax.ShapeDtypeStruct((M, H), jnp.float32),
        grid_spec=pltpu.PrefetchScalarGridSpec(
            num_scalar_prefetch=0,
            grid=(1,),                       # no tiling: whole problem fits VMEM
            in_specs=[_whole((M, H))] + [_whole(w.shape) for w in weights],
            out_specs=_whole((M, H)),
        ),
        compiler_params=pltpu.CompilerParams(
            dimension_semantics=("arbitrary",)),
    )(xr, *weights)
    return out.reshape(B, d1, d2, H)


# ---------------------------------------------------------------------------
# Parameter init (matches PyTorch module init semantics, deterministic)
# ---------------------------------------------------------------------------
def init_params(key, H, heads):
    hs = H // heads
    ks = jax.random.split(key, 5)

    # gammas = 1 - exp(linspace(log(1/32), log(1/512), heads))
    gammas = 1.0 - jnp.exp(
        jnp.linspace(math.log(1.0 / 32.0), math.log(1.0 / 512.0), heads))

    # SimpleRetentions: W_R_h = randn(hs, hs) / hs, one per head.
    wr_heads = jax.random.normal(ks[0], (heads, hs, hs), jnp.float32) / hs
    wr_bd = jnp.zeros((H, H), jnp.float32)
    for h in range(heads):
        wr_bd = wr_bd.at[h * hs:(h + 1) * hs, h * hs:(h + 1) * hs].set(
            wr_heads[h])

    w_g = jax.random.normal(ks[1], (H, H), jnp.float32) / H
    w_o = jax.random.normal(ks[2], (H, H), jnp.float32) / H

    # GroupNorm affine (randomized slightly to exercise the affine path).
    gn_w = 1.0 + 0.1 * jax.random.normal(ks[3], (H,), jnp.float32)
    gn_b = 0.1 * jax.random.normal(ks[4], (H,), jnp.float32)

    gidx = jnp.arange(H) // hs
    gmask = (gidx[:, None] == gidx[None, :]).astype(jnp.float32) / hs

    return dict(
        # reference-side (per-head) forms
        wr_heads=wr_heads,
        w_g=w_g,
        w_o=w_o,
        gammas=gammas,
        gn_w_vec=gn_w,
        gn_b_vec=gn_b,
        # kernel-side precomputed forms (host-side, once)
        w_rg=jnp.concatenate([wr_bd, w_g], axis=1),      # (H, 2H)
        gamma=jnp.repeat(gammas, hs)[None, :].astype(jnp.float32),  # (1, H)
        gmask=gmask,                                     # (H, H)
        gn_w=gn_w[None, :],                              # (1, H)
        gn_b=gn_b[None, :],                              # (1, H)
    )


# ---------------------------------------------------------------------------
# Pure-JAX reference (mirrors the PyTorch module literally, per head)
# ---------------------------------------------------------------------------
def multiscale_retention_reference(x, params, heads):
    B, d1, d2, H = x.shape
    hs = H // heads
    z = x.reshape(-1, H)

    ys = []
    for h in range(heads):
        xh = z[:, h * hs:(h + 1) * hs]
        ys.append(xh + params["gammas"][h] * jnp.tanh(xh @ params["wr_heads"][h]))
    y = jnp.concatenate(ys, axis=-1)

    yg = y.reshape(-1, heads, hs)
    mu = yg.mean(-1, keepdims=True)
    var = ((yg - mu) ** 2).mean(-1, keepdims=True)
    yn = ((yg - mu) / jnp.sqrt(var + EPS)).reshape(-1, H)
    yn = yn * params["gn_w_vec"] + params["gn_b_vec"]

    out = (jax.nn.sigmoid(z @ params["w_g"]) * yn) @ params["w_o"]
    return out.reshape(B, d1, d2, H)


# ---------------------------------------------------------------------------
if __name__ == "__main__":
    # MultiScaleRetention(hidden_size=32, heads=4); input X is 4-D with the
    # hidden dim last (as sliced in the PyTorch forward): (batch, node, seq, H)
    B, node_number, T, H, heads = 2, 4, 8, 32, 4

    key = jax.random.PRNGKey(0)
    kx, kp = jax.random.split(key)
    x = jax.random.normal(kx, (B, node_number, T, H), dtype=jnp.float32)
    params = init_params(kp, H, heads)

    out = multiscale_retention_forward(x, params)
    out = jax.block_until_ready(out)

    ref = multiscale_retention_reference(x, params, heads)
    assert out.shape == x.shape, out.shape
    np.testing.assert_allclose(np.asarray(out), np.asarray(ref),
                               atol=1e-3, rtol=1e-3)
    print("KERNEL_OK")
</pallas_src>

<mosaic_0001>
module attributes {stable_mosaic.version = 11 : i64} {
  func.func @_msr_kernel(%arg0: i32, %arg1: memref<64x32xf32, #tpu.memory_space<vmem>>, %arg2: memref<32x64xf32, #tpu.memory_space<vmem>>, %arg3: memref<1x32xf32, #tpu.memory_space<vmem>>, %arg4: memref<32x32xf32, #tpu.memory_space<vmem>>, %arg5: memref<1x32xf32, #tpu.memory_space<vmem>>, %arg6: memref<1x32xf32, #tpu.memory_space<vmem>>, %arg7: memref<32x32xf32, #tpu.memory_space<vmem>>, %arg8: memref<64x32xf32, #tpu.memory_space<vmem>>) attributes {dimension_semantics = [#tpu.dimension_semantics<arbitrary>], iteration_bounds = array<i64: 1>, scalar_prefetch = 0 : i64, scratch_operands = 0 : i64, tpu.core_type = #tpu.core_type<tc>, window_params = [{pipeline_mode = #tpu.pipeline_mode<synchronous>, transform_indices = @transform_0, window_bounds = array<i64: 64, 32>}, {pipeline_mode = #tpu.pipeline_mode<synchronous>, transform_indices = @transform_1, window_bounds = array<i64: 32, 64>}, {pipeline_mode = #tpu.pipeline_mode<synchronous>, transform_indices = @transform_2, window_bounds = array<i64: 1, 32>}, {pipeline_mode = #tpu.pipeline_mode<synchronous>, transform_indices = @transform_3, window_bounds = array<i64: 32, 32>}, {pipeline_mode = #tpu.pipeline_mode<synchronous>, transform_indices = @transform_4, window_bounds = array<i64: 1, 32>}, {pipeline_mode = #tpu.pipeline_mode<synchronous>, transform_indices = @transform_5, window_bounds = array<i64: 1, 32>}, {pipeline_mode = #tpu.pipeline_mode<synchronous>, transform_indices = @transform_6, window_bounds = array<i64: 32, 32>}, {pipeline_mode = #tpu.pipeline_mode<synchronous>, transform_indices = @transform_7, window_bounds = array<i64: 64, 32>}]} {
    %c0 = arith.constant 0 : index
    %c0_0 = arith.constant 0 : index
    %0 = vector.load %arg1[%c0, %c0_0] : memref<64x32xf32, #tpu.memory_space<vmem>>, vector<64x32xf32>
    %c0_1 = arith.constant 0 : index
    %c0_2 = arith.constant 0 : index
    %1 = vector.load %arg2[%c0_1, %c0_2] : memref<32x64xf32, #tpu.memory_space<vmem>>, vector<32x64xf32>
    %cst = arith.constant dense<0.000000e+00> : vector<64x64xf32>
    %2 = tpu.matmul %0, %1, %cst {dimension_numbers = #tpu.dot_dimension_numbers<[1], [0], [0], [1], [0, 0, 1, 1], [], []>} : vector<64x32xf32>, vector<32x64xf32>, vector<64x64xf32> -> vector<64x64xf32>
    %3 = vector.extract_strided_slice %2 {offsets = [0, 0], sizes = [64, 32], strides = [1, 1]} : vector<64x64xf32> to vector<64x32xf32>
    %4 = vector.extract_strided_slice %2 {offsets = [0, 32], sizes = [64, 32], strides = [1, 1]} : vector<64x64xf32> to vector<64x32xf32>
    %c0_3 = arith.constant 0 : index
    %c0_4 = arith.constant 0 : index
    %5 = vector.load %arg3[%c0_3, %c0_4] : memref<1x32xf32, #tpu.memory_space<vmem>>, vector<1x32xf32>
    %6 = math.tanh %3 : vector<64x32xf32>
    %7 = vector.broadcast %5 : vector<1x32xf32> to vector<64x32xf32>
    %8 = arith.mulf %7, %6 : vector<64x32xf32>
    %9 = arith.addf %0, %8 : vector<64x32xf32>
    %c0_5 = arith.constant 0 : index
    %c0_6 = arith.constant 0 : index
    %10 = vector.load %arg4[%c0_5, %c0_6] : memref<32x32xf32, #tpu.memory_space<vmem>>, vector<32x32xf32>
    %cst_7 = arith.constant dense<0.000000e+00> : vector<64x32xf32>
    %11 = tpu.matmul %9, %10, %cst_7 {dimension_numbers = #tpu.dot_dimension_numbers<[1], [0], [0], [1], [0, 0, 1, 1], [], []>} : vector<64x32xf32>, vector<32x32xf32>, vector<64x32xf32> -> vector<64x32xf32>
    %12 = arith.subf %9, %11 : vector<64x32xf32>
    %13 = arith.mulf %12, %12 : vector<64x32xf32>
    %cst_8 = arith.constant dense<0.000000e+00> : vector<64x32xf32>
    %14 = tpu.matmul %13, %10, %cst_8 {dimension_numbers = #tpu.dot_dimension_numbers<[1], [0], [0], [1], [0, 0, 1, 1], [], []>} : vector<64x32xf32>, vector<32x32xf32>, vector<64x32xf32> -> vector<64x32xf32>
    %cst_9 = arith.constant 9.99999974E-6 : f32
    %15 = vector.broadcast %cst_9 : f32 to vector<64x32xf32>
    %16 = arith.addf %14, %15 : vector<64x32xf32>
    %17 = math.rsqrt %16 : vector<64x32xf32>
    %18 = arith.mulf %12, %17 : vector<64x32xf32>
    %c0_10 = arith.constant 0 : index
    %c0_11 = arith.constant 0 : index
    %19 = vector.load %arg5[%c0_10, %c0_11] : memref<1x32xf32, #tpu.memory_space<vmem>>, vector<1x32xf32>
    %20 = vector.broadcast %19 : vector<1x32xf32> to vector<64x32xf32>
    %21 = arith.mulf %18, %20 : vector<64x32xf32>
    %c0_12 = arith.constant 0 : index
    %c0_13 = arith.constant 0 : index
    %22 = vector.load %arg6[%c0_12, %c0_13] : memref<1x32xf32, #tpu.memory_space<vmem>>, vector<1x32xf32>
    %23 = vector.broadcast %22 : vector<1x32xf32> to vector<64x32xf32>
    %24 = arith.addf %21, %23 : vector<64x32xf32>
    %25 = arith.negf %4 : vector<64x32xf32>
    %26 = math.exp %25 : vector<64x32xf32>
    %cst_14 = arith.constant 1.000000e+00 : f32
    %27 = vector.broadcast %cst_14 : f32 to vector<64x32xf32>
    %28 = arith.addf %27, %26 : vector<64x32xf32>
    %29 = arith.divf %27, %28 : vector<64x32xf32>
    %30 = arith.mulf %29, %24 : vector<64x32xf32>
    %c0_15 = arith.constant 0 : index
    %c0_16 = arith.constant 0 : index
    %31 = vector.load %arg7[%c0_15, %c0_16] : memref<32x32xf32, #tpu.memory_space<vmem>>, vector<32x32xf32>
    %cst_17 = arith.constant dense<0.000000e+00> : vector<64x32xf32>
    %32 = tpu.matmul %30, %31, %cst_17 {dimension_numbers = #tpu.dot_dimension_numbers<[1], [0], [0], [1], [0, 0, 1, 1], [], []>} : vector<64x32xf32>, vector<32x32xf32>, vector<64x32xf32> -> vector<64x32xf32>
    %c0_18 = arith.constant 0 : index
    %c0_19 = arith.constant 0 : index
    %33 = vector.load %arg8[%c0_18, %c0_19] : memref<64x32xf32, #tpu.memory_space<vmem>>, vector<64x32xf32>
    tpu.vector_store %arg8[%c0_18, %c0_19], %32 {strides = array<i32>} : memref<64x32xf32, #tpu.memory_space<vmem>>, vector<64x32xf32>,
    return
  }
  func.func @transform_0(%arg0: i32) -> (i32, i32) {
    %c0_i32 = arith.constant 0 : i32
    %c0_i32_0 = arith.constant 0 : i32
    %c0_i32_1 = arith.constant 0 : i32
    return %c0_i32, %c0_i32_0 : i32, i32
  }
  func.func @transform_1(%arg0: i32) -> (i32, i32) {
    %c0_i32 = arith.constant 0 : i32
    %c0_i32_0 = arith.constant 0 : i32
    %c0_i32_1 = arith.constant 0 : i32
    return %c0_i32, %c0_i32_0 : i32, i32
  }
  func.func @transform_2(%arg0: i32) -> (i32, i32) {
    %c0_i32 = arith.constant 0 : i32
    %c0_i32_0 = arith.constant 0 : i32
    %c0_i32_1 = arith.constant 0 : i32
    return %c0_i32, %c0_i32_0 : i32, i32
  }
  func.func @transform_3(%arg0: i32) -> (i32, i32) {
    %c0_i32 = arith.constant 0 : i32
    %c0_i32_0 = arith.constant 0 : i32
    %c0_i32_1 = arith.constant 0 : i32
    return %c0_i32, %c0_i32_0 : i32, i32
  }
  func.func @transform_4(%arg0: i32) -> (i32, i32) {
    %c0_i32 = arith.constant 0 : i32
    %c0_i32_0 = arith.constant 0 : i32
    %c0_i32_1 = arith.constant 0 : i32
    return %c0_i32, %c0_i32_0 : i32, i32
  }
  func.func @transform_5(%arg0: i32) -> (i32, i32) {
    %c0_i32 = arith.constant 0 : i32
    %c0_i32_0 = arith.constant 0 : i32
    %c0_i32_1 = arith.constant 0 : i32
    return %c0_i32, %c0_i32_0 : i32, i32
  }
  func.func @transform_6(%arg0: i32) -> (i32, i32) {
    %c0_i32 = arith.constant 0 : i32
    %c0_i32_0 = arith.constant 0 : i32
    %c0_i32_1 = arith.constant 0 : i32
    return %c0_i32, %c0_i32_0 : i32, i32
  }
  func.func @transform_7(%arg0: i32) -> (i32, i32) {
    %c0_i32 = arith.constant 0 : i32
    %c0_i32_0 = arith.constant 0 : i32
    %c0_i32_1 = arith.constant 0 : i32
    return %c0_i32, %c0_i32_0 : i32, i32
  }
}

</mosaic_0001>

<llo_original>
// kernel: tpu_custom_call.1
$region0: #{tpu_custom_call.1}
  #allocation0 [shape = 'u32[]', space=smem, size = 0x4, offset = 0x4, fixed_abs, tag = 'smem constant byte address 0x4 - core index']
  #allocation1 [shape = 'u32[72,128]{1,0:T(1,128)}', space=vmem, size = 0x9000, scoped, tag = 'internal scratch']
  %s0 = inlined_call_operand.vmem [shape: f32[64,32], index: 0, kind: input, shape index: {}]
  %s1 = inlined_call_operand.vmem [shape: f32[32,64], index: 1, kind: input, shape index: {}]
  %s2 = inlined_call_operand.vmem [shape: f32[1,32], index: 2, kind: input, shape index: {}]
  %s3 = inlined_call_operand.vmem [shape: f32[32,32], index: 3, kind: input, shape index: {}]
  %s4 = inlined_call_operand.vmem [shape: f32[1,32], index: 4, kind: input, shape index: {}]
  %s5 = inlined_call_operand.vmem [shape: f32[1,32], index: 5, kind: input, shape index: {}]
  %s6 = inlined_call_operand.vmem [shape: f32[32,32], index: 6, kind: input, shape index: {}]
  %s7 = inlined_call_operand.vmem [shape: f32[64,32], index: 7, kind: output, shape index: {}]
  %s8 = sld [smem:[#allocation0]]
  $region38: #{tpu_custom_call.1} parent=0
    _
  %s10 = ssub.s32 1, %s8
  %s11 = scalar_select 0, %s10, %s8
  // Predicated region
  $region2: #{tpu_custom_call.1} parent=0 // pred_check
    _
  $region3: #{tpu_custom_call.1} parent=0 // pred_check_branch
    %13 = sbr.rel (0) target = $region5
  $region4: #{tpu_custom_call.1} parent=0 // pred_region
    _
  $region5: #{tpu_custom_call.1} parent=0 // pred_fallthru
    _
  // Predicated region
  $region6: #{tpu_custom_call.1} parent=0 // pred_check
    _
  $region7: #{tpu_custom_call.1} parent=0 // pred_check_branch
    %15 = sbr.rel (0) target = $region9
  $region8: #{tpu_custom_call.1} parent=0 // pred_region
    _
  $region9: #{tpu_custom_call.1} parent=0 // pred_fallthru
    _
  // Predicated region
  $region10: #{tpu_custom_call.1} parent=0 // pred_check
    _
  $region11: #{tpu_custom_call.1} parent=0 // pred_check_branch
    %17 = sbr.rel (0) target = $region13
  $region12: #{tpu_custom_call.1} parent=0 // pred_region
    _
  $region13: #{tpu_custom_call.1} parent=0 // pred_fallthru
    _
  // Predicated region
  $region14: #{tpu_custom_call.1} parent=0 // pred_check
    _
  $region15: #{tpu_custom_call.1} parent=0 // pred_check_branch
    %19 = sbr.rel (0) target = $region17
  $region16: #{tpu_custom_call.1} parent=0 // pred_region
    _
  $region17: #{tpu_custom_call.1} parent=0 // pred_fallthru
    _
  // Predicated region
  $region18: #{tpu_custom_call.1} parent=0 // pred_check
    _
  $region19: #{tpu_custom_call.1} parent=0 // pred_check_branch
    %21 = sbr.rel (0) target = $region21
  $region20: #{tpu_custom_call.1} parent=0 // pred_region
    _
  $region21: #{tpu_custom_call.1} parent=0 // pred_fallthru
    _
  // Predicated region
  $region22: #{tpu_custom_call.1} parent=0 // pred_check
    _
  $region23: #{tpu_custom_call.1} parent=0 // pred_check_branch
    %23 = sbr.rel (0) target = $region25
  $region24: #{tpu_custom_call.1} parent=0 // pred_region
    _
  $region25: #{tpu_custom_call.1} parent=0 // pred_fallthru
    _
  // Predicated region
  $region26: #{tpu_custom_call.1} parent=0 // pred_check
    _
  $region27: #{tpu_custom_call.1} parent=0 // pred_check_branch
    %25 = sbr.rel (0) target = $region29
  $region28: #{tpu_custom_call.1} parent=0 // pred_region
    _
  $region29: #{tpu_custom_call.1} parent=0 // pred_fallthru
    _
  %v26 = vld [vmem:[%s0] sm:$0xff]
  %v27 = vld [vmem:[%s0 + $0x8] sm:$0xff]
  %v28 = vld [vmem:[%s0 + $0x10] sm:$0xff]
  %v29 = vld [vmem:[%s0 + $0x18] sm:$0xff]
  %v30 = vld [vmem:[%s0 + $0x20] sm:$0xff]
  %v31 = vld [vmem:[%s0 + $0x28] sm:$0xff]
  %v32 = vld [vmem:[%s0 + $0x30] sm:$0xff]
  %v33 = vld [vmem:[%s0 + $0x38] sm:$0xff]
  %v34 = vld [vmem:[%s1] sm:$0xff]
  %v35 = vld [vmem:[%s1 + $0x8] sm:$0xff]
  %v36 = vld [vmem:[%s1 + $0x10] sm:$0xff]
  %v37 = vld [vmem:[%s1 + $0x18] sm:$0xff]
  %vm38 = vcmask 261120
  %v40 = vsel %vm38, %v26, 0
  %v43 = vsel %vm38, %v27, 0
  %v46 = vsel %vm38, %v28, 0
  %v49 = vsel %vm38, %v29, 0
  %v52 = vsel %vm38, %v30, 0
  %v55 = vsel %vm38, %v31, 0
  %v58 = vsel %vm38, %v32, 0
  %v61 = vsel %vm38, %v33, 0
  %63 = vmatpush.msra.mxu0 0.0
  %64 = vmatpush.msra.mxu0 0.0
  %65 = vmatpush.msra.mxu0 0.0
  %66 = vmatpush.msra.mxu0 0.0
  %67 = vmatpush.msra.mxu0 0.0
  %68 = vmatpush.msra.mxu0 0.0
  %69 = vmatpush.msra.mxu0 0.0
  %70 = vmatpush.msra.mxu0 0.0
  %71 = vmatpush.msra.mxu0 0.0
  %72 = vmatpush.msra.mxu0 0.0
  %73 = vmatpush.msra.mxu0 0.0
  %74 = vmatpush.msra.mxu0 0.0
  %75 = vmatpush.msra.mxu0 %v37
  %76 = vmatpush.msra.mxu0 %v36
  %77 = vmatpush.msra.mxu0 %v35
  %78 = vmatpush.msra.mxu0 %v34
  %79 = vmatmul.f32.gmra.mxu0 %v40
  %v80 = vpop.f32.mrf.mxu0
  %v81 = vadd.f32 0.0, %v80
  %82 = vmatmul.f32.gmra.mxu0 %v43
  %v83 = vpop.f32.mrf.mxu0
  %v84 = vadd.f32 0.0, %v83
  %85 = vmatmul.f32.gmra.mxu0 %v46
  %v86 = vpop.f32.mrf.mxu0
  %v87 = vadd.f32 0.0, %v86
  %88 = vmatmul.f32.gmra.mxu0 %v49
  %v89 = vpop.f32.mrf.mxu0
  %v90 = vadd.f32 0.0, %v89
  %91 = vmatmul.f32.gmra.mxu0 %v52
  %v92 = vpop.f32.mrf.mxu0
  %v93 = vadd.f32 0.0, %v92
  %94 = vmatmul.f32.gmra.mxu0 %v55
  %v95 = vpop.f32.mrf.mxu0
  %v96 = vadd.f32 0.0, %v95
  %97 = vmatmul.f32.gmra.mxu0 %v58
  %v98 = vpop.f32.mrf.mxu0
  %v99 = vadd.f32 0.0, %v98
  %100 = vmatmul.f32.gmra.mxu0 %v61
  %v101 = vpop.f32.mrf.mxu0
  %v102 = vadd.f32 0.0, %v101
  %103 = vdwg.mxu0
  %v104 = vld [vmem:[%s2] sm:$0x1]
  %v105 = vtanh.pop %v81
  %v106 = vtanh.pop %v84
  %v107 = vtanh.pop %v87
  %v108 = vtanh.pop %v90
  %v109 = vtanh.pop %v93
  %v110 = vtanh.pop %v96
  %v111 = vtanh.pop %v99
  %v112 = vtanh.pop %v102
  %v114 = vperm.slane %v104, 0
  %v116 = vmul.f32 %v114, %v105
  %v117 = vmul.f32 %v114, %v106
  %v118 = vmul.f32 %v114, %v107
  %v119 = vmul.f32 %v114, %v108
  %v120 = vmul.f32 %v114, %v109
  %v121 = vmul.f32 %v114, %v110
  %v122 = vmul.f32 %v114, %v111
  %v123 = vmul.f32 %v114, %v112
  %v124 = vadd.f32 %v26, %v116
  %v125 = vadd.f32 %v27, %v117
  %v126 = vadd.f32 %v28, %v118
  %v127 = vadd.f32 %v29, %v119
  %v128 = vadd.f32 %v30, %v120
  %v129 = vadd.f32 %v31, %v121
  %v130 = vadd.f32 %v32, %v122
  %v131 = vadd.f32 %v33, %v123
  %v132 = vld [vmem:[%s3] sm:$0xff]
  %v133 = vld [vmem:[%s3 + $0x8] sm:$0xff]
  %v134 = vld [vmem:[%s3 + $0x10] sm:$0xff]
  %v135 = vld [vmem:[%s3 + $0x18] sm:$0xff]
  %v137 = vsel %vm38, %v124, 0
  %v140 = vsel %vm38, %v125, 0
  %v143 = vsel %vm38, %v126, 0
  %v146 = vsel %vm38, %v127, 0
  %v149 = vsel %vm38, %v128, 0
  %v152 = vsel %vm38, %v129, 0
  %v155 = vsel %vm38, %v130, 0
  %v158 = vsel %vm38, %v131, 0
  %160 = vmatpush.msra.mxu0 0.0
  %161 = vmatpush.msra.mxu0 0.0
  %162 = vmatpush.msra.mxu0 0.0
  %163 = vmatpush.msra.mxu0 0.0
  %164 = vmatpush.msra.mxu0 0.0
  %165 = vmatpush.msra.mxu0 0.0
  %166 = vmatpush.msra.mxu0 0.0
  %167 = vmatpush.msra.mxu0 0.0
  %168 = vmatpush.msra.mxu0 0.0
  %169 = vmatpush.msra.mxu0 0.0
  %170 = vmatpush.msra.mxu0 0.0
  %171 = vmatpush.msra.mxu0 0.0
  %172 = vmatpush.msra.mxu0 %v135
  %173 = vmatpush.msra.mxu0 %v134
  %174 = vmatpush.msra.mxu0 %v133
  %175 = vmatpush.msra.mxu0 %v132
  %176 = vmatmul.f32.gmra.mxu0 %v137
  %v177 = vpop.f32.mrf.mxu0
  %v178 = vadd.f32 0.0, %v177
  %179 = vmatmul.f32.gmra.mxu0 %v140
  %v180 = vpop.f32.mrf.mxu0
  %v181 = vadd.f32 0.0, %v180
  %182 = vmatmul.f32.gmra.mxu0 %v143
  %v183 = vpop.f32.mrf.mxu0
  %v184 = vadd.f32 0.0, %v183
  %185 = vmatmul.f32.gmra.mxu0 %v146
  %v186 = vpop.f32.mrf.mxu0
  %v187 = vadd.f32 0.0, %v186
  %188 = vmatmul.f32.gmra.mxu0 %v149
  %v189 = vpop.f32.mrf.mxu0
  %v190 = vadd.f32 0.0, %v189
  %191 = vmatmul.f32.gmra.mxu0 %v152
  %v192 = vpop.f32.mrf.mxu0
  %v193 = vadd.f32 0.0, %v192
  %194 = vmatmul.f32.gmra.mxu0 %v155
  %v195 = vpop.f32.mrf.mxu0
  %v196 = vadd.f32 0.0, %v195
  %197 = vmatmul.f32.gmra.mxu0 %v158
  %v198 = vpop.f32.mrf.mxu0
  %v199 = vadd.f32 0.0, %v198
  %200 = vdwg.mxu0
  %v201 = vsub.f32 %v124, %v178
  %v202 = vsub.f32 %v125, %v181
  %v203 = vsub.f32 %v126, %v184
  %v204 = vsub.f32 %v127, %v187
  %v205 = vsub.f32 %v128, %v190
  %v206 = vsub.f32 %v129, %v193
  %v207 = vsub.f32 %v130, %v196
  %v208 = vsub.f32 %v131, %v199
  %v209 = vmul.f32 %v201, %v201
  %v210 = vmul.f32 %v202, %v202
  %v211 = vmul.f32 %v203, %v203
  %v212 = vmul.f32 %v204, %v204
  %v213 = vmul.f32 %v205, %v205
  %v214 = vmul.f32 %v206, %v206
  %v215 = vmul.f32 %v207, %v207
  %v216 = vmul.f32 %v208, %v208
  %v218 = vsel %vm38, %v209, 0
  %v221 = vsel %vm38, %v210, 0
  %v224 = vsel %vm38, %v211, 0
  %v227 = vsel %vm38, %v212, 0
  %v230 = vsel %vm38, %v213, 0
  %v233 = vsel %vm38, %v214, 0
  %v236 = vsel %vm38, %v215, 0
  %v239 = vsel %vm38, %v216, 0
  %241 = vmatpush.msra.mxu0 0.0
  %242 = vmatpush.msra.mxu0 0.0
  %243 = vmatpush.msra.mxu0 0.0
  %244 = vmatpush.msra.mxu0 0.0
  %245 = vmatpush.msra.mxu0 0.0
  %246 = vmatpush.msra.mxu0 0.0
  %247 = vmatpush.msra.mxu0 0.0
  %248 = vmatpush.msra.mxu0 0.0
  %249 = vmatpush.msra.mxu0 0.0
  %250 = vmatpush.msra.mxu0 0.0
  %251 = vmatpush.msra.mxu0 0.0
  %252 = vmatpush.msra.mxu0 0.0
  %253 = vmatpush.msra.mxu0 %v135
  %254 = vmatpush.msra.mxu0 %v134
  %255 = vmatpush.msra.mxu0 %v133
  %256 = vmatpush.msra.mxu0 %v132
  %257 = vmatmul.f32.gmra.mxu0 %v218
  %v258 = vpop.f32.mrf.mxu0
  %v259 = vadd.f32 1e-05, %v258
  %260 = vmatmul.f32.gmra.mxu0 %v221
  %v261 = vpop.f32.mrf.mxu0
  %v262 = vadd.f32 1e-05, %v261
  %263 = vmatmul.f32.gmra.mxu0 %v224
  %v264 = vpop.f32.mrf.mxu0
  %v265 = vadd.f32 1e-05, %v264
  %266 = vmatmul.f32.gmra.mxu0 %v227
  %v267 = vpop.f32.mrf.mxu0
  %v268 = vadd.f32 1e-05, %v267
  %269 = vmatmul.f32.gmra.mxu0 %v230
  %v270 = vpop.f32.mrf.mxu0
  %v271 = vadd.f32 1e-05, %v270
  %272 = vmatmul.f32.gmra.mxu0 %v233
  %v273 = vpop.f32.mrf.mxu0
  %v274 = vadd.f32 1e-05, %v273
  %275 = vmatmul.f32.gmra.mxu0 %v236
  %v276 = vpop.f32.mrf.mxu0
  %v277 = vadd.f32 1e-05, %v276
  %278 = vmatmul.f32.gmra.mxu0 %v239
  %v279 = vpop.f32.mrf.mxu0
  %v280 = vadd.f32 1e-05, %v279
  %281 = vdwg.mxu0
  %v282 = vrsqrt.pop %v259
  %v283 = vmul.f32 %v282, %v259
  %v284 = vmul.f32 %v283, %v282
  %v285 = vmul.f32 0.5, %v284
  %v286 = vsub.f32 1.5, %v285
  %v287 = vmul.f32 %v282, %v286
  %vm288 = vweird.f32 %v259
  %vm289 = vweird.f32 %v282
  %vm290 = vmor %vm288, %vm289
  %v291 = vsel %vm290, %v282, %v287
  %v292 = vrsqrt.pop %v262
  %v293 = vmul.f32 %v292, %v262
  %v294 = vmul.f32 %v293, %v292
  %v295 = vmul.f32 0.5, %v294
  %v296 = vsub.f32 1.5, %v295
  %v297 = vmul.f32 %v292, %v296
  %vm298 = vweird.f32 %v262
  %vm299 = vweird.f32 %v292
  %vm300 = vmor %vm298, %vm299
  %v301 = vsel %vm300, %v292, %v297
  %v302 = vrsqrt.pop %v265
  %v303 = vmul.f32 %v302, %v265
  %v304 = vmul.f32 %v303, %v302
  %v305 = vmul.f32 0.5, %v304
  %v306 = vsub.f32 1.5, %v305
  %v307 = vmul.f32 %v302, %v306
  %vm308 = vweird.f32 %v265
  %vm309 = vweird.f32 %v302
  %vm310 = vmor %vm308, %vm309
  %v311 = vsel %vm310, %v302, %v307
  %v312 = vrsqrt.pop %v268
  %v313 = vmul.f32 %v312, %v268
  %v314 = vmul.f32 %v313, %v312
  %v315 = vmul.f32 0.5, %v314
  %v316 = vsub.f32 1.5, %v315
  %v317 = vmul.f32 %v312, %v316
  %vm318 = vweird.f32 %v268
  %vm319 = vweird.f32 %v312
  %vm320 = vmor %vm318, %vm319
  %v321 = vsel %vm320, %v312, %v317
  %v322 = vrsqrt.pop %v271
  %v323 = vmul.f32 %v322, %v271
  %v324 = vmul.f32 %v323, %v322
  %v325 = vmul.f32 0.5, %v324
  %v326 = vsub.f32 1.5, %v325
  %v327 = vmul.f32 %v322, %v326
  %vm328 = vweird.f32 %v271
  %vm329 = vweird.f32 %v322
  %vm330 = vmor %vm328, %vm329
  %v331 = vsel %vm330, %v322, %v327
  %v332 = vrsqrt.pop %v274
  %v333 = vmul.f32 %v332, %v274
  %v334 = vmul.f32 %v333, %v332
  %v335 = vmul.f32 0.5, %v334
  %v336 = vsub.f32 1.5, %v335
  %v337 = vmul.f32 %v332, %v336
  %vm338 = vweird.f32 %v274
  %vm339 = vweird.f32 %v332
  %vm340 = vmor %vm338, %vm339
  %v341 = vsel %vm340, %v332, %v337
  %v342 = vrsqrt.pop %v277
  %v343 = vmul.f32 %v342, %v277
  %v344 = vmul.f32 %v343, %v342
  %v345 = vmul.f32 0.5, %v344
  %v346 = vsub.f32 1.5, %v345
  %v347 = vmul.f32 %v342, %v346
  %vm348 = vweird.f32 %v277
  %vm349 = vweird.f32 %v342
  %vm350 = vmor %vm348, %vm349
  %v351 = vsel %vm350, %v342, %v347
  %v352 = vrsqrt.pop %v280
  %v353 = vmul.f32 %v352, %v280
  %v354 = vmul.f32 %v353, %v352
  %v355 = vmul.f32 0.5, %v354
  %v356 = vsub.f32 1.5, %v355
  %v357 = vmul.f32 %v352, %v356
  %vm358 = vweird.f32 %v280
  %vm359 = vweird.f32 %v352
  %vm360 = vmor %vm358, %vm359
  %v361 = vsel %vm360, %v352, %v357
  %v362 = vmul.f32 %v201, %v291
  %v363 = vmul.f32 %v202, %v301
  %v364 = vmul.f32 %v203, %v311
  %v365 = vmul.f32 %v204, %v321
  %v366 = vmul.f32 %v205, %v331
  %v367 = vmul.f32 %v206, %v341
  %v368 = vmul.f32 %v207, %v351
  %v369 = vmul.f32 %v208, %v361
  %v370 = vld [vmem:[%s4] sm:$0x1]
  %v372 = vperm.slane %v370, 0
  %v374 = vmul.f32 %v362, %v372
  %v375 = vmul.f32 %v363, %v372
  %v376 = vmul.f32 %v364, %v372
  %v377 = vmul.f32 %v365, %v372
  %v378 = vmul.f32 %v366, %v372
  %v379 = vmul.f32 %v367, %v372
  %v380 = vmul.f32 %v368, %v372
  %v381 = vmul.f32 %v369, %v372
  %v382 = vld [vmem:[%s5] sm:$0x1]
  %v384 = vperm.slane %v382, 0
  %v386 = vadd.f32 %v374, %v384
  %v387 = vadd.f32 %v375, %v384
  %v388 = vadd.f32 %v376, %v384
  %v389 = vadd.f32 %v377, %v384
  %v390 = vadd.f32 %v378, %v384
  %v391 = vadd.f32 %v379, %v384
  %v392 = vadd.f32 %v380, %v384
  %v393 = vadd.f32 %v381, %v384
  %v394 = vxor.u32 %v81, 2147483648
  %v395 = vxor.u32 %v84, 2147483648
  %v396 = vxor.u32 %v87, 2147483648
  %v397 = vxor.u32 %v90, 2147483648
  %v398 = vxor.u32 %v93, 2147483648
  %v399 = vxor.u32 %v96, 2147483648
  %v400 = vxor.u32 %v99, 2147483648
  %v401 = vxor.u32 %v102, 2147483648
  %v402 = vmul.f32 %v394, 1.442695
  %v403 = vpow.pop %v402
  %v404 = vmul.f32 %v395, 1.442695
  %v405 = vpow.pop %v404
  %v406 = vmul.f32 %v396, 1.442695
  %v407 = vpow.pop %v406
  %v408 = vmul.f32 %v397, 1.442695
  %v409 = vpow.pop %v408
  %v410 = vmul.f32 %v398, 1.442695
  %v411 = vpow.pop %v410
  %v412 = vmul.f32 %v399, 1.442695
  %v413 = vpow.pop %v412
  %v414 = vmul.f32 %v400, 1.442695
  %v415 = vpow.pop %v414
  %v416 = vmul.f32 %v401, 1.442695
  %v417 = vpow.pop %v416
  %v418 = vadd.f32 %v403, 1.0
  %v419 = vadd.f32 %v405, 1.0
  %v420 = vadd.f32 %v407, 1.0
  %v421 = vadd.f32 %v409, 1.0
  %v422 = vadd.f32 %v411, 1.0
  %v423 = vadd.f32 %v413, 1.0
  %v424 = vadd.f32 %v415, 1.0
  %v425 = vadd.f32 %v417, 1.0
  %v426 = vrcp.pop %v418
  %v427 = vmul.f32 %v418, %v426
  %v428 = vsub.f32 1.0, %v427
  %v429 = vmul.f32 %v426, %v428
  %v430 = vadd.f32 %v426, %v429
  %vm431 = vweird.f32 %v418
  %vm432 = vweird.f32 %v426
  %vm433 = vmor %vm431, %vm432
  %v434 = vsel %vm433, %v426, %v430
  %v435 = vand.u32 2147483647, %v418
  %vm436 = vcmp.eq.f32.partialorder %v435, 8.507059e+37
  %v437 = vand.u32 %v418, 2147483648
  %v438 = vor.u32 1.1754944e-38, %v437
  %v439 = vsel %vm436, %v438, %v434
  %v440 = vmul.f32 1.0, %v439
  %v441 = vrcp.pop %v419
  %v442 = vmul.f32 %v419, %v441
  %v443 = vsub.f32 1.0, %v442
  %v444 = vmul.f32 %v441, %v443
  %v445 = vadd.f32 %v441, %v444
  %vm446 = vweird.f32 %v419
  %vm447 = vweird.f32 %v441
  %vm448 = vmor %vm446, %vm447
  %v449 = vsel %vm448, %v441, %v445
  %v450 = vand.u32 2147483647, %v419
  %vm451 = vcmp.eq.f32.partialorder %v450, 8.507059e+37
  %v452 = vand.u32 %v419, 2147483648
  %v453 = vor.u32 1.1754944e-38, %v452
  %v454 = vsel %vm451, %v453, %v449
  %v455 = vmul.f32 1.0, %v454
  %v456 = vrcp.pop %v420
  %v457 = vmul.f32 %v420, %v456
  %v458 = vsub.f32 1.0, %v457
  %v459 = vmul.f32 %v456, %v458
  %v460 = vadd.f32 %v456, %v459
  %vm461 = vweird.f32 %v420
  %vm462 = vweird.f32 %v456
  %vm463 = vmor %vm461, %vm462
  %v464 = vsel %vm463, %v456, %v460
  %v465 = vand.u32 2147483647, %v420
  %vm466 = vcmp.eq.f32.partialorder %v465, 8.507059e+37
  %v467 = vand.u32 %v420, 2147483648
  %v468 = vor.u32 1.1754944e-38, %v467
  %v469 = vsel %vm466, %v468, %v464
  %v470 = vmul.f32 1.0, %v469
  %v471 = vrcp.pop %v421
  %v472 = vmul.f32 %v421, %v471
  %v473 = vsub.f32 1.0, %v472
  %v474 = vmul.f32 %v471, %v473
  %v475 = vadd.f32 %v471, %v474
  %vm476 = vweird.f32 %v421
  %vm477 = vweird.f32 %v471
  %vm478 = vmor %vm476, %vm477
  %v479 = vsel %vm478, %v471, %v475
  %v480 = vand.u32 2147483647, %v421
  %vm481 = vcmp.eq.f32.partialorder %v480, 8.507059e+37
  %v482 = vand.u32 %v421, 2147483648
  %v483 = vor.u32 1.1754944e-38, %v482
  %v484 = vsel %vm481, %v483, %v479
  %v485 = vmul.f32 1.0, %v484
  %v486 = vrcp.pop %v422
  %v487 = vmul.f32 %v422, %v486
  %v488 = vsub.f32 1.0, %v487
  %v489 = vmul.f32 %v486, %v488
  %v490 = vadd.f32 %v486, %v489
  %vm491 = vweird.f32 %v422
  %vm492 = vweird.f32 %v486
  %vm493 = vmor %vm491, %vm492
  %v494 = vsel %vm493, %v486, %v490
  %v495 = vand.u32 2147483647, %v422
  %vm496 = vcmp.eq.f32.partialorder %v495, 8.507059e+37
  %v497 = vand.u32 %v422, 2147483648
  %v498 = vor.u32 1.1754944e-38, %v497
  %v499 = vsel %vm496, %v498, %v494
  %v500 = vmul.f32 1.0, %v499
  %v501 = vrcp.pop %v423
  %v502 = vmul.f32 %v423, %v501
  %v503 = vsub.f32 1.0, %v502
  %v504 = vmul.f32 %v501, %v503
  %v505 = vadd.f32 %v501, %v504
  %vm506 = vweird.f32 %v423
  %vm507 = vweird.f32 %v501
  %vm508 = vmor %vm506, %vm507
  %v509 = vsel %vm508, %v501, %v505
  %v510 = vand.u32 2147483647, %v423
  %vm511 = vcmp.eq.f32.partialorder %v510, 8.507059e+37
  %v512 = vand.u32 %v423, 2147483648
  %v513 = vor.u32 1.1754944e-38, %v512
  %v514 = vsel %vm511, %v513, %v509
  %v515 = vmul.f32 1.0, %v514
  %v516 = vrcp.pop %v424
  %v517 = vmul.f32 %v424, %v516
  %v518 = vsub.f32 1.0, %v517
  %v519 = vmul.f32 %v516, %v518
  %v520 = vadd.f32 %v516, %v519
  %vm521 = vweird.f32 %v424
  %vm522 = vweird.f32 %v516
  %vm523 = vmor %vm521, %vm522
  %v524 = vsel %vm523, %v516, %v520
  %v525 = vand.u32 2147483647, %v424
  %vm526 = vcmp.eq.f32.partialorder %v525, 8.507059e+37
  %v527 = vand.u32 %v424, 2147483648
  %v528 = vor.u32 1.1754944e-38, %v527
  %v529 = vsel %vm526, %v528, %v524
  %v530 = vmul.f32 1.0, %v529
  %v531 = vrcp.pop %v425
  %v532 = vmul.f32 %v425, %v531
  %v533 = vsub.f32 1.0, %v532
  %v534 = vmul.f32 %v531, %v533
  %v535 = vadd.f32 %v531, %v534
  %vm536 = vweird.f32 %v425
  %vm537 = vweird.f32 %v531
  %vm538 = vmor %vm536, %vm537
  %v539 = vsel %vm538, %v531, %v535
  %v540 = vand.u32 2147483647, %v425
  %vm541 = vcmp.eq.f32.partialorder %v540, 8.507059e+37
  %v542 = vand.u32 %v425, 2147483648
  %v543 = vor.u32 1.1754944e-38, %v542
  %v544 = vsel %vm541, %v543, %v539
  %v545 = vmul.f32 1.0, %v544
  %554 = vrot.lane.b32.xlu0 %v386, 32
  %v555 = vpop.permute.xlu0 %554
  %556 = vrot.lane.b32.xlu0 %v387, 32
  %v557 = vpop.permute.xlu0 %556
  %558 = vrot.lane.b32.xlu0 %v388, 32
  %v559 = vpop.permute.xlu0 %558
  %560 = vrot.lane.b32.xlu0 %v389, 32
  %v561 = vpop.permute.xlu0 %560
  %562 = vrot.lane.b32.xlu0 %v390, 32
  %v563 = vpop.permute.xlu0 %562
  %564 = vrot.lane.b32.xlu0 %v391, 32
  %v565 = vpop.permute.xlu0 %564
  %566 = vrot.lane.b32.xlu0 %v392, 32
  %v567 = vpop.permute.xlu0 %566
  %568 = vrot.lane.b32.xlu0 %v393, 32
  %v569 = vpop.permute.xlu0 %568
  %v578 = vmul.f32 %v440, %v555
  %v579 = vmul.f32 %v455, %v557
  %v580 = vmul.f32 %v470, %v559
  %v581 = vmul.f32 %v485, %v561
  %v582 = vmul.f32 %v500, %v563
  %v583 = vmul.f32 %v515, %v565
  %v584 = vmul.f32 %v530, %v567
  %v585 = vmul.f32 %v545, %v569
  %v586 = vld [vmem:[%s6] sm:$0xff]
  %v587 = vld [vmem:[%s6 + $0x8] sm:$0xff]
  %v588 = vld [vmem:[%s6 + $0x10] sm:$0xff]
  %v589 = vld [vmem:[%s6 + $0x18] sm:$0xff]
  %598 = vrot.lane.b32.xlu0 %v578, 96
  %v599 = vpop.permute.xlu0 %598
  %600 = vrot.lane.b32.xlu0 %v579, 96
  %v601 = vpop.permute.xlu0 %600
  %602 = vrot.lane.b32.xlu0 %v580, 96
  %v603 = vpop.permute.xlu0 %602
  %604 = vrot.lane.b32.xlu0 %v581, 96
  %v605 = vpop.permute.xlu0 %604
  %606 = vrot.lane.b32.xlu0 %v582, 96
  %v607 = vpop.permute.xlu0 %606
  %608 = vrot.lane.b32.xlu0 %v583, 96
  %v609 = vpop.permute.xlu0 %608
  %610 = vrot.lane.b32.xlu0 %v584, 96
  %v611 = vpop.permute.xlu0 %610
  %612 = vrot.lane.b32.xlu0 %v585, 96
  %v613 = vpop.permute.xlu0 %612
  %v614 = vsel %vm38, %v599, 0
  %v616 = vsel %vm38, %v601, 0
  %v618 = vsel %vm38, %v603, 0
  %v620 = vsel %vm38, %v605, 0
  %v622 = vsel %vm38, %v607, 0
  %v624 = vsel %vm38, %v609, 0
  %v626 = vsel %vm38, %v611, 0
  %v628 = vsel %vm38, %v613, 0
  %630 = vmatpush.msra.mxu0 0.0
  %631 = vmatpush.msra.mxu0 0.0
  %632 = vmatpush.msra.mxu0 0.0
  %633 = vmatpush.msra.mxu0 0.0
  %634 = vmatpush.msra.mxu0 0.0
  %635 = vmatpush.msra.mxu0 0.0
  %636 = vmatpush.msra.mxu0 0.0
  %637 = vmatpush.msra.mxu0 0.0
  %638 = vmatpush.msra.mxu0 0.0
  %639 = vmatpush.msra.mxu0 0.0
  %640 = vmatpush.msra.mxu0 0.0
  %641 = vmatpush.msra.mxu0 0.0
  %642 = vmatpush.msra.mxu0 %v589
  %643 = vmatpush.msra.mxu0 %v588
  %644 = vmatpush.msra.mxu0 %v587
  %645 = vmatpush.msra.mxu0 %v586
  %646 = vmatmul.f32.gmra.mxu0 %v614
  %v647 = vpop.f32.mrf.mxu0
  %v648 = vadd.f32 0.0, %v647
  %649 = vmatmul.f32.gmra.mxu0 %v616
  %v650 = vpop.f32.mrf.mxu0
  %v651 = vadd.f32 0.0, %v650
  %652 = vmatmul.f32.gmra.mxu0 %v618
  %v653 = vpop.f32.mrf.mxu0
  %v654 = vadd.f32 0.0, %v653
  %655 = vmatmul.f32.gmra.mxu0 %v620
  %v656 = vpop.f32.mrf.mxu0
  %v657 = vadd.f32 0.0, %v656
  %658 = vmatmul.f32.gmra.mxu0 %v622
  %v659 = vpop.f32.mrf.mxu0
  %v660 = vadd.f32 0.0, %v659
  %661 = vmatmul.f32.gmra.mxu0 %v624
  %v662 = vpop.f32.mrf.mxu0
  %v663 = vadd.f32 0.0, %v662
  %664 = vmatmul.f32.gmra.mxu0 %v626
  %v665 = vpop.f32.mrf.mxu0
  %v666 = vadd.f32 0.0, %v665
  %667 = vmatmul.f32.gmra.mxu0 %v628
  %v668 = vpop.f32.mrf.mxu0
  %v669 = vadd.f32 0.0, %v668
  %670 = vdwg.mxu0
  %671 = vst.msk [vmem:[%s7] sm:$0xff] %vm38, %v648
  %672 = vst.msk [vmem:[%s7 + $0x8] sm:$0xff] %vm38, %v651
  %673 = vst.msk [vmem:[%s7 + $0x10] sm:$0xff] %vm38, %v654
  %674 = vst.msk [vmem:[%s7 + $0x18] sm:$0xff] %vm38, %v657
  %675 = vst.msk [vmem:[%s7 + $0x20] sm:$0xff] %vm38, %v660
  %676 = vst.msk [vmem:[%s7 + $0x28] sm:$0xff] %vm38, %v663
  %677 = vst.msk [vmem:[%s7 + $0x30] sm:$0xff] %vm38, %v666
  %678 = vst.msk [vmem:[%s7 + $0x38] sm:$0xff] %vm38, %v669
  // Predicated region
  $region30: #{tpu_custom_call.1} parent=0 // pred_check
    _
  $region31: #{tpu_custom_call.1} parent=0 // pred_check_branch
    %680 = sbr.rel (0) target = $region33
  $region32: #{tpu_custom_call.1} parent=0 // pred_region
    _
  $region33: #{tpu_custom_call.1} parent=0 // pred_fallthru
    _
  // Predicated region
  $region34: #{tpu_custom_call.1} parent=0 // pred_check
    _
  $region35: #{tpu_custom_call.1} parent=0 // pred_check_branch
    %682 = sbr.rel (0) target = $region37
  $region36: #{tpu_custom_call.1} parent=0 // pred_region
    _
  $region37: #{tpu_custom_call.1} parent=0 // pred_fallthru
    _

</llo_original>
